<compile_context>
chip_gen: v5e
topology: v5e:2x2
jax: 0.10.0
libtpu: 0.0.40
codegen_flags: <defaults>
</compile_context>

<pallas_src>
import functools

import jax
import jax.numpy as jnp
from jax.experimental import pallas as pl
from jax.experimental.pallas import tpu as pltpu


def _round_up(x, m):
    return ((x + m - 1) // m) * m


def _cdiv(a, b):
    return -(-a // b)


def _tpu_config():
    """Per-generation tuning knobs (row tile, VMEM budget, lane alignment)."""
    kind = ""
    try:
        kind = jax.devices()[0].device_kind.lower()
    except Exception:  # pragma: no cover - device query best effort
        pass
    if "v7" in kind or "7x" in kind:
        # 64 MiB physical VMEM per TC, 2 TCs/chip, ~3.2 TB/s HBM.
        return dict(name="v7x", vmem_budget=48 << 20, tm=512,
                    lane_align=256, min_row_tiles=2)
    if "v6" in kind:
        # 128 MiB VMEM, ~1.4 TB/s HBM => needs big row tiles to be compute-bound.
        return dict(name="v6e", vmem_budget=100 << 20, tm=768,
                    lane_align=256, min_row_tiles=1)
    if "v5" in kind:
        # 128 MiB VMEM, 4x128^2 MXU, single vst slot => tm=256 is the balance point.
        return dict(name="v5e", vmem_budget=96 << 20, tm=256,
                    lane_align=128, min_row_tiles=1)
    # Unknown generation: conservative (fits a 64 MiB VMEM part).
    return dict(name="unknown", vmem_budget=48 << 20, tm=256,
                lane_align=128, min_row_tiles=2)


def ffn_kernel(x_ref, w1_ref, b1_ref, w2_ref, b2_ref, o_ref, *scratch,
               tc, out_is_acc):
    """One row tile x one dff slab: acc += relu(x @ W1^T + b1) @ W2^T (+ b2 at k==0)."""
    acc = o_ref if out_is_acc else scratch[0]
    k = pl.program_id(1)

    @pl.when(k == 0)
    def _init():
        # Fold b2 into the accumulator init: single broadcast, no extra epilogue pass.
        acc[...] = jnp.broadcast_to(b2_ref[...], acc.shape).astype(acc.dtype)

    # In-kernel cast of the activation tile (hides under the MXU; avoids a
    # separate full-HBM bf16 copy in the wrapper).
    x = x_ref[...].astype(w1_ref.dtype)

    n_chunks = w1_ref.shape[1] // tc
    # Static (view) slices over the dff slab: keeps the f32 hidden live set at
    # (tm, tc) instead of (tm, tf), so it stays in vregs and matmul2 of chunk j
    # overlaps the VPU bias/ReLU of chunk j+1.
    for j in range(n_chunks):
        cols = slice(j * tc, (j + 1) * tc)
        h = jnp.dot(x, w1_ref[:, cols], preferred_element_type=jnp.float32)
        h = jnp.maximum(h + b1_ref[:, cols], 0.0)
        acc[...] += jnp.dot(h.astype(w2_ref.dtype), w2_ref[cols, :],
                            preferred_element_type=jnp.float32).astype(acc.dtype)

    if not out_is_acc:
        @pl.when(k == pl.num_programs(1) - 1)
        def _finalize():
            o_ref[...] = acc[...].astype(o_ref.dtype)


def prepare_ffn_params(w1, b1, w2, b2, *, compute_dtype=jnp.bfloat16, tf=None,
                       cfg=None):
    """One-time parameter prep: transpose, pad to lane-aligned sizes, cast.

    w1: (dff, dinput), b1: (dff,), w2: (dinput, dff), b2: (dinput,)
    (PyTorch nn.Linear layout: y = x @ W.T + b).
    """
    cfg = _tpu_config() if cfg is None else cfg
    lane = cfg["lane_align"]
    dff, dinput = w1.shape
    dinput_p = _round_up(dinput, lane)
    wbytes = jnp.dtype(compute_dtype).itemsize

    if tf is None:
        # Prefer full weight residency (single k step => weights DMA'd once and
        # reused by every row tile). Only stream dff in tf-sized slabs when the
        # double-buffered weight tiles would blow the generation's VMEM budget.
        act_reserve = cfg["tm"] * dinput_p * 16 + (8 << 20)
        weight_budget = max(cfg["vmem_budget"] - act_reserve, 8 << 20)
        tf = _round_up(dff, lane)
        while 2 * 2 * dinput_p * tf * wbytes > weight_budget and tf > lane:
            tf = max(lane, _round_up(tf // 2, lane))
    assert tf % 128 == 0
    dff_p = _round_up(dff, tf)

    w1_t = jnp.zeros((dinput_p, dff_p), compute_dtype)
    w1_t = w1_t.at[:dinput, :dff].set(jnp.transpose(w1).astype(compute_dtype))
    w2_t = jnp.zeros((dff_p, dinput_p), compute_dtype)
    w2_t = w2_t.at[:dff, :dinput].set(jnp.transpose(w2).astype(compute_dtype))
    b1_p = jnp.zeros((1, dff_p), jnp.float32).at[0, :dff].set(b1.astype(jnp.float32))
    b2_p = jnp.zeros((1, dinput_p), jnp.float32).at[0, :dinput].set(b2.astype(jnp.float32))

    return dict(w1_t=w1_t, b1=b1_p, w2_t=w2_t, b2=b2_p,
                dinput=dinput, dff=dff, dinput_p=dinput_p, dff_p=dff_p,
                tf=tf, compute_dtype=compute_dtype, cfg=cfg)


def feed_forward(x, params, *, tm=None):
    """x: (..., dinput); params: output of prepare_ffn_params. Returns x.shape."""
    cfg = params["cfg"]
    dinput = params["dinput"]
    dinput_p = params["dinput_p"]
    dff_p = params["dff_p"]
    tf = params["tf"]
    compute_dtype = params["compute_dtype"]

    orig_shape = x.shape
    assert orig_shape[-1] == dinput
    x2d = x.reshape(-1, dinput)
    M = x2d.shape[0]

    out_is_acc = (x.dtype == jnp.float32)   # f32 output: accumulate in o_ref directly
    xbytes = jnp.dtype(x.dtype).itemsize
    obytes = xbytes
    wbytes = jnp.dtype(compute_dtype).itemsize

    # Hidden chunk width: 256 when tf allows it (2x256^2 MXU friendly), else 128.
    tc = 256 if tf % 256 == 0 else 128
    tc = min(tc, tf)

    # Row tile: multiple of 16 (bf16 sublane packing), generation default,
    # clamped to M.
    if tm is None:
        tm = cfg["tm"]
    tm_eff = min(_round_up(tm, 16), _round_up(M, 16))

    # v7x: guarantee >= 2 row tiles so both TensorCores get work.
    while (tm_eff > 16 and cfg["min_row_tiles"] > 1
           and _cdiv(M, tm_eff) < cfg["min_row_tiles"]):
        tm_eff = _round_up(max(16, tm_eff // 2), 16)

    def footprint(tm_):
        f = 2 * tm_ * dinput_p * xbytes            # x tiles (double buffered)
        f += 2 * tm_ * dinput_p * obytes           # output tiles
        f += 2 * dinput_p * tf * wbytes            # W1^T tiles
        f += 2 * tf * dinput_p * wbytes            # W2^T tiles
        f += 2 * 8 * (tf + dinput_p) * 4           # bias tiles (sublane padded)
        if not out_is_acc:
            f += tm_ * dinput_p * 4                # f32 accumulator scratch
        f += tm_ * dinput_p * 4                    # live matmul2 partial
        f += tm_ * tc * (4 + wbytes)               # live hidden chunk (f32 + cast)
        f += tm_ * dinput_p * wbytes               # bf16 copy of x tile
        return f

    budget = cfg["vmem_budget"]
    while tm_eff > 16 and footprint(tm_eff) > budget:
        tm_eff = _round_up(max(16, tm_eff // 2), 16)

    M_p = _round_up(M, tm_eff)
    if (M_p, dinput_p) != (M, dinput):
        x2d = jnp.pad(x2d, ((0, M_p - M), (0, dinput_p - dinput)))

    n_k = dff_p // tf
    grid = (M_p // tm_eff, n_k)

    vmem_limit = int(min(max(int(footprint(tm_eff) * 1.25) + (4 << 20), 32 << 20),
                         budget))

    # Advisory cost estimate so XLA schedules/overlaps the custom call sensibly.
    flops = 4 * M_p * dinput_p * dff_p
    weight_bytes = 2 * dinput_p * dff_p * wbytes
    bytes_accessed = int(M_p * dinput_p * (xbytes + obytes)
                         + weight_bytes * (1 if n_k == 1 else M_p // tm_eff))

    kernel = functools.partial(ffn_kernel, tc=tc, out_is_acc=out_is_acc)
    scratch_shapes = ([] if out_is_acc
                      else [pltpu.VMEM((tm_eff, dinput_p), jnp.float32)])

    out2d = pl.pallas_call(
        kernel,
        out_shape=jax.ShapeDtypeStruct((M_p, dinput_p), x.dtype),
        grid_spec=pltpu.PrefetchScalarGridSpec(
            num_scalar_prefetch=0,
            grid=grid,
            in_specs=[
                pl.BlockSpec((tm_eff, dinput_p), lambda i, k: (i, 0)),  # x rows
                pl.BlockSpec((dinput_p, tf), lambda i, k: (0, k)),      # W1^T slab
                pl.BlockSpec((1, tf), lambda i, k: (0, k)),             # b1 slab
                pl.BlockSpec((tf, dinput_p), lambda i, k: (k, 0)),      # W2^T slab
                pl.BlockSpec((1, dinput_p), lambda i, k: (0, 0)),       # b2
            ],
            out_specs=pl.BlockSpec((tm_eff, dinput_p), lambda i, k: (i, 0)),
            scratch_shapes=scratch_shapes,
        ),
        compiler_params=pltpu.CompilerParams(
            dimension_semantics=("parallel", "arbitrary"),
            vmem_limit_bytes=vmem_limit),
        cost_estimate=pl.CostEstimate(flops=flops, transcendentals=0,
                                      bytes_accessed=bytes_accessed),
    )(x2d, params["w1_t"], params["b1"], params["w2_t"], params["b2"])

    return out2d[:M, :dinput].reshape(orig_shape)


def init_params(key, dinput, dff, dtype=jnp.float32):
    """Deterministic init matching nn.Linear's uniform(-1/sqrt(fan_in), ...)."""
    k1, k2, k3, k4 = jax.random.split(key, 4)
    bound1 = 1.0 / (dinput ** 0.5)
    bound2 = 1.0 / (dff ** 0.5)
    w1 = jax.random.uniform(k1, (dff, dinput), dtype, -bound1, bound1)
    b1 = jax.random.uniform(k2, (dff,), dtype, -bound1, bound1)
    w2 = jax.random.uniform(k3, (dinput, dff), dtype, -bound2, bound2)
    b2 = jax.random.uniform(k4, (dinput,), dtype, -bound2, bound2)
    return w1, b1, w2, b2


if __name__ == "__main__":
    key = jax.random.PRNGKey(0)
    kx, kp, kx2 = jax.random.split(key, 3)

    batch, seq, dinput, dff = 2, 8, 32, 64
    x = jax.random.normal(kx, (batch, seq, dinput), jnp.float32)
    w1, b1, w2, b2 = init_params(kp, dinput, dff)

    # One-time parameter prep (transpose + pad + cast to bf16 MXU operands).
    params = prepare_ffn_params(w1, b1, w2, b2)

    out = feed_forward(x, params)
    out = jax.block_until_ready(out)

    # Reference in f32 (same math as PyTorch forward). bf16 operands => loose tol.
    ref = jnp.maximum(x @ w1.T + b1, 0.0) @ w2.T + b2
    assert out.shape == x.shape
    assert jnp.allclose(out, ref, atol=5e-2, rtol=5e-2), \
        float(jnp.max(jnp.abs(out - ref)))

    # Second call with non-tile-aligned rows (exercises the M/dinput padding path).
    x2 = jax.random.normal(kx2, (3, 5, dinput), jnp.float32)
    out2 = jax.block_until_ready(feed_forward(x2, params))
    ref2 = jnp.maximum(x2 @ w1.T + b1, 0.0) @ w2.T + b2
    assert out2.shape == x2.shape
    assert jnp.allclose(out2, ref2, atol=5e-2, rtol=5e-2)

    print("KERNEL_OK")
</pallas_src>

<mosaic_0001>
module attributes {stable_mosaic.version = 11 : i64} {
  func.func @ffn_kernel(%arg0: i32, %arg1: i32, %arg2: memref<16x128xf32, #tpu.memory_space<vmem>>, %arg3: memref<128x128xbf16, #tpu.memory_space<vmem>>, %arg4: memref<1x128xf32, #tpu.memory_space<vmem>>, %arg5: memref<128x128xbf16, #tpu.memory_space<vmem>>, %arg6: memref<1x128xf32, #tpu.memory_space<vmem>>, %arg7: memref<16x128xf32, #tpu.memory_space<vmem>>) attributes {dimension_semantics = [#tpu.dimension_semantics<parallel>, #tpu.dimension_semantics<arbitrary>], iteration_bounds = array<i64: 1, 1>, scalar_prefetch = 0 : i64, scratch_operands = 0 : i64, tpu.core_type = #tpu.core_type<tc>, window_params = [{transform_indices = @transform_0, window_bounds = array<i64: 16, 128>}, {transform_indices = @transform_1, window_bounds = array<i64: 128, 128>}, {transform_indices = @transform_2, window_bounds = array<i64: 1, 128>}, {transform_indices = @transform_3, window_bounds = array<i64: 128, 128>}, {pipeline_mode = #tpu.pipeline_mode<synchronous>, transform_indices = @transform_4, window_bounds = array<i64: 1, 128>}, {transform_indices = @transform_5, window_bounds = array<i64: 16, 128>}]} {
    %c0_i32 = arith.constant 0 : i32
    %0 = arith.cmpi eq, %arg1, %c0_i32 : i32
    %1 = arith.extui %0 : i1 to i32
    %c0_i32_0 = arith.constant 0 : i32
    %2 = arith.cmpi ne, %1, %c0_i32_0 : i32
    scf.if %2 {
      %c0_14 = arith.constant 0 : index
      %c0_15 = arith.constant 0 : index
      %18 = vector.load %arg6[%c0_14, %c0_15] : memref<1x128xf32, #tpu.memory_space<vmem>>, vector<1x128xf32>
      %19 = vector.shape_cast %18 : vector<1x128xf32> to vector<1x128xf32>
      %20 = vector.broadcast %19 : vector<1x128xf32> to vector<16x128xf32>
      %c0_16 = arith.constant 0 : index
      %c0_17 = arith.constant 0 : index
      %21 = vector.load %arg7[%c0_16, %c0_17] : memref<16x128xf32, #tpu.memory_space<vmem>>, vector<16x128xf32>
      tpu.vector_store %arg7[%c0_16, %c0_17], %20 {strides = array<i32>} : memref<16x128xf32, #tpu.memory_space<vmem>>, vector<16x128xf32>,
    } else {
    }
    %c0 = arith.constant 0 : index
    %c0_1 = arith.constant 0 : index
    %3 = vector.load %arg2[%c0, %c0_1] : memref<16x128xf32, #tpu.memory_space<vmem>>, vector<16x128xf32>
    %4 = arith.truncf %3 : vector<16x128xf32> to vector<16x128xbf16>
    %c0_2 = arith.constant 0 : index
    %c0_3 = arith.constant 0 : index
    %5 = vector.load %arg3[%c0_2, %c0_3] : memref<128x128xbf16, #tpu.memory_space<vmem>>, vector<128x128xbf16>
    %cst = arith.constant dense<0.000000e+00> : vector<16x128xf32>
    %6 = tpu.matmul %4, %5, %cst {dimension_numbers = #tpu.dot_dimension_numbers<[1], [0], [0], [1], [0, 0, 1, 1], [], []>} : vector<16x128xbf16>, vector<128x128xbf16>, vector<16x128xf32> -> vector<16x128xf32>
    %c0_4 = arith.constant 0 : index
    %c0_5 = arith.constant 0 : index
    %7 = vector.load %arg4[%c0_4, %c0_5] : memref<1x128xf32, #tpu.memory_space<vmem>>, vector<1x128xf32>
    %8 = vector.broadcast %7 : vector<1x128xf32> to vector<16x128xf32>
    %9 = arith.addf %6, %8 : vector<16x128xf32>
    %cst_6 = arith.constant 0.000000e+00 : f32
    %10 = vector.broadcast %cst_6 : f32 to vector<16x128xf32>
    %11 = arith.maximumf %9, %10 : vector<16x128xf32>
    %c0_7 = arith.constant 0 : index
    %c0_8 = arith.constant 0 : index
    %12 = vector.load %arg7[%c0_7, %c0_8] : memref<16x128xf32, #tpu.memory_space<vmem>>, vector<16x128xf32>
    %13 = arith.truncf %11 : vector<16x128xf32> to vector<16x128xbf16>
    %c0_9 = arith.constant 0 : index
    %c0_10 = arith.constant 0 : index
    %14 = vector.load %arg5[%c0_9, %c0_10] : memref<128x128xbf16, #tpu.memory_space<vmem>>, vector<128x128xbf16>
    %cst_11 = arith.constant dense<0.000000e+00> : vector<16x128xf32>
    %15 = tpu.matmul %13, %14, %cst_11 {dimension_numbers = #tpu.dot_dimension_numbers<[1], [0], [0], [1], [0, 0, 1, 1], [], []>} : vector<16x128xbf16>, vector<128x128xbf16>, vector<16x128xf32> -> vector<16x128xf32>
    %16 = arith.addf %12, %15 : vector<16x128xf32>
    %c0_12 = arith.constant 0 : index
    %c0_13 = arith.constant 0 : index
    %17 = vector.load %arg7[%c0_12, %c0_13] : memref<16x128xf32, #tpu.memory_space<vmem>>, vector<16x128xf32>
    tpu.vector_store %arg7[%c0_12, %c0_13], %16 {strides = array<i32>} : memref<16x128xf32, #tpu.memory_space<vmem>>, vector<16x128xf32>,
    return
  }
  func.func @transform_0(%arg0: i32, %arg1: i32) -> (i32, i32) {
    %c0_i32 = arith.constant 0 : i32
    %c0_i32_0 = arith.constant 0 : i32
    return %arg0, %c0_i32 : i32, i32
  }
  func.func @transform_1(%arg0: i32, %arg1: i32) -> (i32, i32) {
    %c0_i32 = arith.constant 0 : i32
    %c0_i32_0 = arith.constant 0 : i32
    return %c0_i32, %arg1 : i32, i32
  }
  func.func @transform_2(%arg0: i32, %arg1: i32) -> (i32, i32) {
    %c0_i32 = arith.constant 0 : i32
    %c0_i32_0 = arith.constant 0 : i32
    return %c0_i32, %arg1 : i32, i32
  }
  func.func @transform_3(%arg0: i32, %arg1: i32) -> (i32, i32) {
    %c0_i32 = arith.constant 0 : i32
    %c0_i32_0 = arith.constant 0 : i32
    return %arg1, %c0_i32 : i32, i32
  }
  func.func @transform_4(%arg0: i32, %arg1: i32) -> (i32, i32) {
    %c0_i32 = arith.constant 0 : i32
    %c0_i32_0 = arith.constant 0 : i32
    %c0_i32_1 = arith.constant 0 : i32
    return %c0_i32, %c0_i32_0 : i32, i32
  }
  func.func @transform_5(%arg0: i32, %arg1: i32) -> (i32, i32) {
    %c0_i32 = arith.constant 0 : i32
    %c0_i32_0 = arith.constant 0 : i32
    return %arg0, %c0_i32 : i32, i32
  }
}

</mosaic_0001>

<llo_original>
// kernel: tpu_custom_call.1
$region0: #{tpu_custom_call.1}
  #allocation0 [shape = 'u32[]', space=smem, size = 0x4, offset = 0x4, fixed_abs, tag = 'smem constant byte address 0x4 - core index']
  #allocation1 [shape = 'u32[72,128]{1,0:T(1,128)}', space=vmem, size = 0x9000, scoped, tag = 'internal scratch']
  %s0 = inlined_call_operand.hbm [shape: f32[16,128], index: 0, kind: input, shape index: {}]
  %s1 = inlined_call_operand.hbm [shape: bf16[128,128], index: 1, kind: input, shape index: {}]
  %s2 = inlined_call_operand.vmem [shape: f32[1,128], index: 2, kind: input, shape index: {}]
  %s3 = inlined_call_operand.hbm [shape: bf16[128,128], index: 3, kind: input, shape index: {}]
  %s4 = inlined_call_operand.vmem [shape: f32[1,128], index: 4, kind: input, shape index: {}]
  %s5 = inlined_call_operand.hbm [shape: f32[16,128], index: 5, kind: output, shape index: {}]
  %s6 = sld [smem:[#allocation0]]
  $region46: #{tpu_custom_call.1} parent=0
    _
  %s8 = ssub.s32 1, %s6
  %s9 = scalar_select 0, %s8, %s6
  $region1: #{tpu_custom_call.1} parent=0
    #allocation2 [shape = 'u8[8192]{0}', space=vmem, size = 0x2000, scoped, tag = 'input window, operand 0, single buffered']
    #allocation3 [shape = 's32[1]{0}', space=sflag, size = 0x4, scoped, tag = 'scoped memory for tpu_custom_call.1']
    #allocation4 [shape = 's32[1]{0}', space=sflag, size = 0x4, scoped, tag = 'scoped memory for tpu_custom_call.1']
    #allocation5 [shape = 'u8[32768]{0}', space=vmem, size = 0x8000, scoped, tag = 'input window, operand 1, single buffered']
    #allocation6 [shape = 's32[1]{0}', space=sflag, size = 0x4, scoped, tag = 'scoped memory for tpu_custom_call.1']
    #allocation7 [shape = 'u8[32768]{0}', space=vmem, size = 0x8000, scoped, tag = 'input window, operand 3, single buffered']
    #allocation8 [shape = 'u8[8192]{0}', space=vmem, size = 0x2000, scoped, tag = 'output window, operand 0, single buffered']
    %10 = vsyncpa [#allocation3], 0
    %11 = vsyncpa [#allocation6], 0
    %12 = vsyncpa [#allocation4], 0
    // Predicated region
    $region2: #{tpu_custom_call.1} parent=1 // pred_check
      _
    $region3: #{tpu_custom_call.1} parent=1 // pred_check_branch
      %14 = sbr.rel (0) target = $region5
    $region4: #{tpu_custom_call.1} parent=1 // pred_region
      %16 = vsyncadd [#allocation3], 0
      %s17 = sshll.u32 %s0, 4
      %s18 = int_to_ptr.hbm [resolvable:$true] %s17
      %s19 = sshll.u32 [#allocation2], 4
      %s20 = int_to_ptr.vmem [resolvable:$true] %s19
      %25 = dma.hbm_to_vmem [thread:$0]  %s18, 256, %s20, [#allocation3], 128, 128, 8
    $region5: #{tpu_custom_call.1} parent=1 // pred_fallthru
      _
    // Predicated region
    $region6: #{tpu_custom_call.1} parent=1 // pred_check
      _
    $region7: #{tpu_custom_call.1} parent=1 // pred_check_branch
      %27 = sbr.rel (0) target = $region9
    $region8: #{tpu_custom_call.1} parent=1 // pred_region
      %29 = vsyncadd [#allocation6], 0
      %s30 = sshll.u32 %s1, 4
      %s31 = int_to_ptr.hbm [resolvable:$true] %s30
      %s32 = sshll.u32 [#allocation5], 4
      %s33 = int_to_ptr.vmem [resolvable:$true] %s32
      %38 = dma.hbm_to_vmem [thread:$0]  %s31, 1024, %s33, [#allocation6], 64, 64, 4
    $region9: #{tpu_custom_call.1} parent=1 // pred_fallthru
      _
    // Predicated region
    $region10: #{tpu_custom_call.1} parent=1 // pred_check
      _
    $region11: #{tpu_custom_call.1} parent=1 // pred_check_branch
      %40 = sbr.rel (0) target = $region13
    $region12: #{tpu_custom_call.1} parent=1 // pred_region
      _
    $region13: #{tpu_custom_call.1} parent=1 // pred_fallthru
      _
    // Predicated region
    $region14: #{tpu_custom_call.1} parent=1 // pred_check
      _
    $region15: #{tpu_custom_call.1} parent=1 // pred_check_branch
      %42 = sbr.rel (0) target = $region17
    $region16: #{tpu_custom_call.1} parent=1 // pred_region
      %44 = vsyncadd [#allocation6], 0
      %s45 = sshll.u32 %s3, 4
      %s46 = int_to_ptr.hbm [resolvable:$true] %s45
      %s47 = sshll.u32 [#allocation7], 4
      %s48 = int_to_ptr.vmem [resolvable:$true] %s47
      %53 = dma.hbm_to_vmem [thread:$0]  %s46, 1024, %s48, [#allocation6], 64, 64, 4
    $region17: #{tpu_custom_call.1} parent=1 // pred_fallthru
      _
    // Predicated region
    $region18: #{tpu_custom_call.1} parent=1 // pred_check
      _
    $region19: #{tpu_custom_call.1} parent=1 // pred_check_branch
      %55 = sbr.rel (0) target = $region21
    $region20: #{tpu_custom_call.1} parent=1 // pred_region
      _
    $region21: #{tpu_custom_call.1} parent=1 // pred_fallthru
      _
    // Predicated region
    $region22: #{tpu_custom_call.1} parent=1 // pred_check
      _
    $region23: #{tpu_custom_call.1} parent=1 // pred_check_branch
      %57 = sbr.rel (0) target = $region25
    $region24: #{tpu_custom_call.1} parent=1 // pred_region
      %59 = dma.done [#allocation3], 256
    $region25: #{tpu_custom_call.1} parent=1 // pred_fallthru
      _
    // Predicated region
    $region26: #{tpu_custom_call.1} parent=1 // pred_check
      _
    $region27: #{tpu_custom_call.1} parent=1 // pred_check_branch
      %61 = sbr.rel (0) target = $region29
    $region28: #{tpu_custom_call.1} parent=1 // pred_region
      %63 = dma.done [#allocation6], 1024
    $region29: #{tpu_custom_call.1} parent=1 // pred_fallthru
      _
    // Predicated region
    $region30: #{tpu_custom_call.1} parent=1 // pred_check
      _
    $region31: #{tpu_custom_call.1} parent=1 // pred_check_branch
      %65 = sbr.rel (0) target = $region33
    $region32: #{tpu_custom_call.1} parent=1 // pred_region
      %67 = dma.done [#allocation6], 1024
    $region33: #{tpu_custom_call.1} parent=1 // pred_fallthru
      _
    %p68 = scmp.eq.s32.totalorder 0, 0
    // Predicated region
    $region34: #{tpu_custom_call.1} parent=1 // pred_check
      %p69 = pneg %p68
    $region35: #{tpu_custom_call.1} parent=1 // pred_check_branch
      %71 = sbr.rel (%p69) target = $region37
    $region36: #{tpu_custom_call.1} parent=1 // pred_region
      %v72 = vld [vmem:[%s4] sm:$0x1]
      %v74 = vperm.slane %v72, 0
      %76 = vst [vmem:[#allocation8] sm:$0xff] %v74
      %77 = vst [vmem:[#allocation8 + $0x8] sm:$0xff] %v74
    $region37: #{tpu_custom_call.1} parent=1 // pred_fallthru
      _
    %v78 = vld [vmem:[#allocation2] sm:$0xff]
    %v79 = vld [vmem:[#allocation2 + $0x8] sm:$0xff]
    %v80 = vpack.c.bf16 %v79, %v78
    %v81 = vld [vmem:[#allocation5] sm:$0xf]
    %v82 = vld [vmem:[#allocation5 + $0x4] sm:$0xf]
    %v83 = vld [vmem:[#allocation5 + $0x8] sm:$0xf]
    %v84 = vld [vmem:[#allocation5 + $0xc] sm:$0xf]
    %v85 = vld [vmem:[#allocation5 + $0x10] sm:$0xf]
    %v86 = vld [vmem:[#allocation5 + $0x14] sm:$0xf]
    %v87 = vld [vmem:[#allocation5 + $0x18] sm:$0xf]
    %v88 = vld [vmem:[#allocation5 + $0x1c] sm:$0xf]
    %v89 = vld [vmem:[#allocation5 + $0x20] sm:$0xf]
    %v90 = vld [vmem:[#allocation5 + $0x24] sm:$0xf]
    %v91 = vld [vmem:[#allocation5 + $0x28] sm:$0xf]
    %v92 = vld [vmem:[#allocation5 + $0x2c] sm:$0xf]
    %v93 = vld [vmem:[#allocation5 + $0x30] sm:$0xf]
    %v94 = vld [vmem:[#allocation5 + $0x34] sm:$0xf]
    %v95 = vld [vmem:[#allocation5 + $0x38] sm:$0xf]
    %v96 = vld [vmem:[#allocation5 + $0x3c] sm:$0xf]
    %v97 = vld [vmem:[%s2] sm:$0x1]
    %v99 = vperm.slane %v97, 0
    %v117 = vunpack.c.l.b16 %v81
    %v118 = vunpack.c.l.b16 %v82
    %v119 = vunpack.c.l.b16 %v83
    %v120 = vunpack.c.l.b16 %v84
    %v121 = vunpack.c.l.b16 %v85
    %v122 = vunpack.c.l.b16 %v86
    %v123 = vunpack.c.l.b16 %v87
    %v124 = vunpack.c.l.b16 %v88
    %v125 = vunpack.c.l.b16 %v89
    %v126 = vunpack.c.l.b16 %v90
    %v127 = vunpack.c.l.b16 %v91
    %v128 = vunpack.c.l.b16 %v92
    %v129 = vunpack.c.l.b16 %v93
    %v130 = vunpack.c.l.b16 %v94
    %v131 = vunpack.c.l.b16 %v95
    %v132 = vunpack.c.l.b16 %v96
    %v133 = vpack.c.b16 %v118, %v117
    %v134 = vpack.c.b16 %v120, %v119
    %v135 = vpack.c.b16 %v122, %v121
    %v136 = vpack.c.b16 %v124, %v123
    %v137 = vpack.c.b16 %v126, %v125
    %v138 = vpack.c.b16 %v128, %v127
    %v139 = vpack.c.b16 %v130, %v129
    %v140 = vpack.c.b16 %v132, %v131
    %149 = vmatpush.bf16.msra.mxu0 %v140
    %150 = vmatpush.bf16.msra.mxu0 %v139
    %151 = vmatpush.bf16.msra.mxu0 %v138
    %152 = vmatpush.bf16.msra.mxu0 %v137
    %153 = vmatpush.bf16.msra.mxu0 %v136
    %154 = vmatpush.bf16.msra.mxu0 %v135
    %155 = vmatpush.bf16.msra.mxu0 %v134
    %156 = vmatpush.bf16.msra.mxu0 %v133
    %157 = vmatmul.bf16.gmra.mxu0 %v80
    %v158 = vpop.f32.mrf.mxu0
    %v159 = vadd.f32 %v99, %v158
    %v160 = vpop.f32.mrf.mxu0
    %v161 = vadd.f32 %v99, %v160
    %162 = vdwg.mxu0
    %v163 = vmax.f32 %v159, 0.0
    %v164 = vmax.f32 %v161, 0.0
    %v165 = vld [vmem:[#allocation8] sm:$0xff]
    %v166 = vld [vmem:[#allocation8 + $0x8] sm:$0xff]
    %v167 = vpack.c.bf16 %v164, %v163
    %v168 = vld [vmem:[#allocation7] sm:$0xf]
    %v169 = vld [vmem:[#allocation7 + $0x4] sm:$0xf]
    %v170 = vld [vmem:[#allocation7 + $0x8] sm:$0xf]
    %v171 = vld [vmem:[#allocation7 + $0xc] sm:$0xf]
    %v172 = vld [vmem:[#allocation7 + $0x10] sm:$0xf]
    %v173 = vld [vmem:[#allocation7 + $0x14] sm:$0xf]
    %v174 = vld [vmem:[#allocation7 + $0x18] sm:$0xf]
    %v175 = vld [vmem:[#allocation7 + $0x1c] sm:$0xf]
    %v176 = vld [vmem:[#allocation7 + $0x20] sm:$0xf]
    %v177 = vld [vmem:[#allocation7 + $0x24] sm:$0xf]
    %v178 = vld [vmem:[#allocation7 + $0x28] sm:$0xf]
    %v179 = vld [vmem:[#allocation7 + $0x2c] sm:$0xf]
    %v180 = vld [vmem:[#allocation7 + $0x30] sm:$0xf]
    %v181 = vld [vmem:[#allocation7 + $0x34] sm:$0xf]
    %v182 = vld [vmem:[#allocation7 + $0x38] sm:$0xf]
    %v183 = vld [vmem:[#allocation7 + $0x3c] sm:$0xf]
    %v200 = vunpack.c.l.b16 %v168
    %v201 = vunpack.c.l.b16 %v169
    %v202 = vunpack.c.l.b16 %v170
    %v203 = vunpack.c.l.b16 %v171
    %v204 = vunpack.c.l.b16 %v172
    %v205 = vunpack.c.l.b16 %v173
    %v206 = vunpack.c.l.b16 %v174
    %v207 = vunpack.c.l.b16 %v175
    %v208 = vunpack.c.l.b16 %v176
    %v209 = vunpack.c.l.b16 %v177
    %v210 = vunpack.c.l.b16 %v178
    %v211 = vunpack.c.l.b16 %v179
    %v212 = vunpack.c.l.b16 %v180
    %v213 = vunpack.c.l.b16 %v181
    %v214 = vunpack.c.l.b16 %v182
    %v215 = vunpack.c.l.b16 %v183
    %v216 = vpack.c.b16 %v201, %v200
    %v217 = vpack.c.b16 %v203, %v202
    %v218 = vpack.c.b16 %v205, %v204
    %v219 = vpack.c.b16 %v207, %v206
    %v220 = vpack.c.b16 %v209, %v208
    %v221 = vpack.c.b16 %v211, %v210
    %v222 = vpack.c.b16 %v213, %v212
    %v223 = vpack.c.b16 %v215, %v214
    %232 = vmatpush.bf16.msra.mxu0 %v223
    %233 = vmatpush.bf16.msra.mxu0 %v222
    %234 = vmatpush.bf16.msra.mxu0 %v221
    %235 = vmatpush.bf16.msra.mxu0 %v220
    %236 = vmatpush.bf16.msra.mxu0 %v219
    %237 = vmatpush.bf16.msra.mxu0 %v218
    %238 = vmatpush.bf16.msra.mxu0 %v217
    %239 = vmatpush.bf16.msra.mxu0 %v216
    %240 = vmatmul.bf16.gmra.mxu0 %v167
    %v241 = vpop.f32.mrf.mxu0
    %v242 = vadd.f32 0.0, %v241
    %v243 = vpop.f32.mrf.mxu0
    %v244 = vadd.f32 0.0, %v243
    %245 = vdwg.mxu0
    %v246 = vadd.f32 %v165, %v242
    %v247 = vadd.f32 %v166, %v244
    %248 = vst [vmem:[#allocation8] sm:$0xff] %v246
    %249 = vst [vmem:[#allocation8 + $0x8] sm:$0xff] %v247
    // Predicated region
    $region38: #{tpu_custom_call.1} parent=1 // pred_check
      _
    $region39: #{tpu_custom_call.1} parent=1 // pred_check_branch
      %251 = sbr.rel (0) target = $region41
    $region40: #{tpu_custom_call.1} parent=1 // pred_region
      %253 = vsyncadd [#allocation4], 0
      %s254 = sshll.u32 [#allocation8], 4
      %s255 = int_to_ptr.vmem [resolvable:$true] %s254
      %s256 = sshll.u32 %s5, 4
      %s257 = int_to_ptr.hbm [resolvable:$true] %s256
      %262 = dma.vmem_to_hbm [thread:$0]  %s255, 256, %s257, [#allocation4], 128, 128, 8
    $region41: #{tpu_custom_call.1} parent=1 // pred_fallthru
      _
    // Predicated region
    $region42: #{tpu_custom_call.1} parent=1 // pred_check
      _
    $region43: #{tpu_custom_call.1} parent=1 // pred_check_branch
      %264 = sbr.rel (0) target = $region45
    $region44: #{tpu_custom_call.1} parent=1 // pred_region
      %266 = dma.done [#allocation4], 256
    $region45: #{tpu_custom_call.1} parent=1 // pred_fallthru
      _
    %267 = vsyncpa [#allocation3], 1
    %268 = vsyncpa [#allocation6], 1
    %269 = vsyncpa [#allocation4], 1

</llo_original>
